<compile_context>
chip_gen: v7x
topology: tpu7x:2x2x1
jax: 0.10.0
libtpu: 0.0.40
codegen_flags: <defaults>
</compile_context>

<pallas_src>
import jax
import jax.numpy as jnp
from jax import lax
from jax.experimental import pallas as pl
from jax.experimental.pallas import tpu as pltpu


def _round_up(x: int, m: int) -> int:
    return ((x + m - 1) // m) * m


def tds_fc_kernel(x_ref, w1_ref, w2_ref, p_ref, o_ref):
    # x_ref: (tm, F) row tile. w1_ref/w2_ref: (F, F) bf16, already transposed
    # to (in, out) so y = x @ W + b. p_ref: (4, F) f32 = [b1, b2, gamma, beta].
    x = x_ref[...].astype(jnp.float32)          # f32 copy for residual / LN
    xb = x.astype(jnp.bfloat16)                 # bf16 operand for the MXU

    p = p_ref[...].astype(jnp.float32)
    b1 = p[0:1, :]
    b2 = p[1:2, :]
    gamma = p[2:3, :]
    beta = p[3:4, :]

    # fc_block: Linear -> ReLU -> Linear (bf16 matmuls, f32 accumulation)
    h = jnp.dot(xb, w1_ref[...], preferred_element_type=jnp.float32) + b1
    h = jnp.maximum(h, 0.0)
    y = jnp.dot(h.astype(jnp.bfloat16), w2_ref[...],
                preferred_element_type=jnp.float32) + b2

    # residual (f32)
    y = y + x

    # LayerNorm over the full (unpadded) feature dim -- no mask needed.
    mean = jnp.mean(y, axis=-1, keepdims=True)
    centered = y - mean
    var = jnp.mean(centered * centered, axis=-1, keepdims=True)
    y_hat = centered * lax.rsqrt(var + 1e-5)

    o_ref[...] = (y_hat * gamma + beta).astype(o_ref.dtype)


def prepare_params(w1, b1, w2, b2, gamma, beta):
    """One-time parameter prep (do NOT call per forward pass): transpose the
    PyTorch (out, in) weights to (in, out) and cast to bf16; pack the four
    (F,) vectors into a single (4, F) f32 array."""
    w1_t = w1.T.astype(jnp.bfloat16)
    w2_t = w2.T.astype(jnp.bfloat16)
    packed = jnp.stack([b1, b2, gamma, beta]).astype(jnp.float32)   # (4, F)
    return w1_t, w2_t, packed


def _default_vmem_limit() -> int:
    """~75% of physical per-core VMEM: ~48 MiB on v7x, ~96 MiB on v5e/v6e."""
    try:
        info = pltpu.get_tpu_info()
        cap = getattr(info, "vmem_capacity_bytes", None)
        if cap:
            return int(cap) * 3 // 4
    except Exception:
        pass
    return 48 * 1024 * 1024   # safe everywhere (v7x has 64 MiB physical)


def _spec(shape, index_map, buffers):
    """BlockSpec with explicit pipeline depth; default (2) skips the kwarg."""
    if buffers == 2:
        return pl.BlockSpec(shape, index_map)
    try:
        return pl.BlockSpec(shape, index_map, pipeline_mode=pl.Buffered(buffers))
    except TypeError:   # older jax without pipeline_mode: keep default buffering
        return pl.BlockSpec(shape, index_map)


def tds_fully_connected_block(x, w1_t, w2_t, packed, *, tm_max=512,
                              vmem_limit_bytes=None):
    """x: (T, N, F) float32.  w1_t / w2_t / packed come from prepare_params."""
    T, N, F = x.shape
    R = T * N
    x2d = x.reshape(R, F)                      # free (row-major), no pad copy

    if vmem_limit_bytes is None:
        vmem_limit_bytes = _default_vmem_limit()

    # Resident (single-buffered) weight / param bytes.
    weight_bytes = 2 * F * F * 2 + 4 * F * 4

    # x / out pipeline depth: 3-deep in the short-per-tile (HBM-bound) regime.
    buffers_in = 3 if F <= 512 else 2
    buffers_out = buffers_in

    def vmem_estimate(tm_):
        io = (buffers_in + buffers_out) * tm_ * F * 4       # pipelined x/out tiles
        interm = 4 * tm_ * F * 4 + 2 * tm_ * F * 2          # h/y/centered/y_hat + bf16 copies
        return io + interm + weight_bytes

    # --- row-tile selection --------------------------------------------------
    tm = min(tm_max, _round_up(R, 8))
    tm = max(8, (tm // 8) * 8)
    tm_floor = max(8, min(256, tm))            # keep MXU-aligned rows when shrinking
    while tm > tm_floor and vmem_estimate(tm) > vmem_limit_bytes:
        tm = max(tm_floor, ((tm // 2) // 8) * 8)
    # TODO(synk): if the two resident bf16 FxF weights alone exceed the VMEM
    # budget (F >~ 2900 on v7x), fall back to a K/N-tiled weight pipeline
    # instead of shrinking tm further.

    # Give v7x's second TensorCore work: keep >= 2 grid steps when there are
    # enough rows for two MXU-sized tiles (no effect on single-TC v5e/v6e).
    if R >= 512 and pl.cdiv(R, tm) < 2:
        tm = _round_up((R + 1) // 2, 8)

    if tm >= R:
        tm = R                                  # single full-extent block
    grid = pl.cdiv(R, tm)                       # ragged last block is clipped by Pallas
    if grid < 3:
        buffers_in = buffers_out = 2            # deep buffering is pointless here

    cost = pl.CostEstimate(
        flops=int(4 * R * F * F + 10 * R * F),
        transcendentals=int(R),
        bytes_accessed=int(2 * R * F * 4 + 2 * F * F * 2 + 4 * F * 4),
    )

    out2d = pl.pallas_call(
        tds_fc_kernel,
        out_shape=jax.ShapeDtypeStruct((R, F), x.dtype),
        grid_spec=pltpu.PrefetchScalarGridSpec(
            num_scalar_prefetch=0,
            grid=(grid,),
            in_specs=[
                _spec((tm, F), lambda i: (i, 0), buffers_in),   # x row tile
                _spec((F, F), lambda i: (0, 0), 1),             # W1^T (resident, 1 buf)
                _spec((F, F), lambda i: (0, 0), 1),             # W2^T (resident, 1 buf)
                _spec((4, F), lambda i: (0, 0), 1),             # [b1,b2,gamma,beta]
            ],
            out_specs=_spec((tm, F), lambda i: (i, 0), buffers_out),
        ),
        compiler_params=pltpu.CompilerParams(
            dimension_semantics=("parallel",),
            vmem_limit_bytes=vmem_limit_bytes,
        ),
        cost_estimate=cost,
    )(x2d, w1_t, w2_t, packed)

    return out2d.reshape(T, N, F)


def reference_bf16(x, w1, b1, w2, b2, gamma, beta):
    """Pure-JAX reference with the same bf16-matmul / f32-accumulate recipe."""
    xb = x.astype(jnp.bfloat16)
    h = jnp.einsum("tnf,gf->tng", xb, w1.astype(jnp.bfloat16),
                   preferred_element_type=jnp.float32) + b1
    h = jnp.maximum(h, 0.0)
    y = jnp.einsum("tnf,gf->tng", h.astype(jnp.bfloat16),
                   w2.astype(jnp.bfloat16),
                   preferred_element_type=jnp.float32) + b2
    y = y + x
    mean = jnp.mean(y, axis=-1, keepdims=True)
    var = jnp.mean(jnp.square(y - mean), axis=-1, keepdims=True)
    return (y - mean) / jnp.sqrt(var + 1e-5) * gamma + beta


def reference_f32(x, w1, b1, w2, b2, gamma, beta):
    h = jnp.maximum(jnp.einsum("tnf,gf->tng", x, w1) + b1, 0.0)
    y = jnp.einsum("tnf,gf->tng", h, w2) + b2 + x
    mean = jnp.mean(y, axis=-1, keepdims=True)
    var = jnp.mean(jnp.square(y - mean), axis=-1, keepdims=True)
    return (y - mean) / jnp.sqrt(var + 1e-5) * gamma + beta


if __name__ == "__main__":
    T, N, F = 8, 2, 32  # input of shape (T, N, num_features)
    key = jax.random.PRNGKey(0)
    kx, k1, k2, k3, k4 = jax.random.split(key, 5)

    x = jax.random.normal(kx, (T, N, F), dtype=jnp.float32)

    # Deterministic parameter init (PyTorch Linear-style uniform bounds).
    bound = 1.0 / (F ** 0.5)
    w1 = jax.random.uniform(k1, (F, F), jnp.float32, -bound, bound)  # (out, in)
    b1 = jax.random.uniform(k2, (F,), jnp.float32, -bound, bound)
    w2 = jax.random.uniform(k3, (F, F), jnp.float32, -bound, bound)
    b2 = jax.random.uniform(k4, (F,), jnp.float32, -bound, bound)
    gamma = jnp.ones((F,), jnp.float32)   # LayerNorm weight init
    beta = jnp.zeros((F,), jnp.float32)   # LayerNorm bias init

    # One-time parameter preparation (transpose / bf16 / pack).
    w1_t, w2_t, packed = prepare_params(w1, b1, w2, b2, gamma, beta)

    out = tds_fully_connected_block(x, w1_t, w2_t, packed)
    out = jax.block_until_ready(out)

    assert out.shape == (T, N, F)

    # Tight check against a reference using the identical bf16-matmul recipe.
    ref = reference_bf16(x, w1, b1, w2, b2, gamma, beta)
    assert jnp.allclose(out, ref, atol=1e-4, rtol=1e-4), "mismatch vs bf16 reference"

    # Loose sanity check against the full-f32 (PyTorch-equivalent) math.
    ref32 = reference_f32(x, w1, b1, w2, b2, gamma, beta)
    assert jnp.allclose(out, ref32, atol=5e-2, rtol=5e-2), "mismatch vs f32 reference"

    print("KERNEL_OK")
</pallas_src>

<mosaic_0001>
module attributes {stable_mosaic.version = 11 : i64} {
  func.func @tds_fc_kernel(%arg0: i32, %arg1: memref<16x32xf32, #tpu.memory_space<vmem>>, %arg2: memref<32x32xbf16, #tpu.memory_space<vmem>>, %arg3: memref<32x32xbf16, #tpu.memory_space<vmem>>, %arg4: memref<4x32xf32, #tpu.memory_space<vmem>>, %arg5: memref<16x32xf32, #tpu.memory_space<vmem>>) attributes {dimension_semantics = [#tpu.dimension_semantics<parallel>], iteration_bounds = array<i64: 1>, scalar_prefetch = 0 : i64, scratch_operands = 0 : i64, tpu.core_type = #tpu.core_type<tc>, window_params = [{transform_indices = @transform_0, window_bounds = array<i64: 16, 32>}, {pipeline_mode = #tpu.pipeline_mode<synchronous>, transform_indices = @transform_1, window_bounds = array<i64: 32, 32>}, {pipeline_mode = #tpu.pipeline_mode<synchronous>, transform_indices = @transform_2, window_bounds = array<i64: 32, 32>}, {pipeline_mode = #tpu.pipeline_mode<synchronous>, transform_indices = @transform_3, window_bounds = array<i64: 4, 32>}, {transform_indices = @transform_4, window_bounds = array<i64: 16, 32>}]} {
    %c0 = arith.constant 0 : index
    %c0_0 = arith.constant 0 : index
    %0 = vector.load %arg1[%c0, %c0_0] : memref<16x32xf32, #tpu.memory_space<vmem>>, vector<16x32xf32>
    %1 = arith.truncf %0 : vector<16x32xf32> to vector<16x32xbf16>
    %c0_1 = arith.constant 0 : index
    %c0_2 = arith.constant 0 : index
    %2 = vector.load %arg4[%c0_1, %c0_2] : memref<4x32xf32, #tpu.memory_space<vmem>>, vector<4x32xf32>
    %3 = vector.extract_strided_slice %2 {offsets = [0, 0], sizes = [1, 32], strides = [1, 1]} : vector<4x32xf32> to vector<1x32xf32>
    %4 = vector.extract_strided_slice %2 {offsets = [1, 0], sizes = [1, 32], strides = [1, 1]} : vector<4x32xf32> to vector<1x32xf32>
    %5 = vector.extract_strided_slice %2 {offsets = [2, 0], sizes = [1, 32], strides = [1, 1]} : vector<4x32xf32> to vector<1x32xf32>
    %6 = vector.extract_strided_slice %2 {offsets = [3, 0], sizes = [1, 32], strides = [1, 1]} : vector<4x32xf32> to vector<1x32xf32>
    %c0_3 = arith.constant 0 : index
    %c0_4 = arith.constant 0 : index
    %7 = vector.load %arg2[%c0_3, %c0_4] : memref<32x32xbf16, #tpu.memory_space<vmem>>, vector<32x32xbf16>
    %cst = arith.constant dense<0.000000e+00> : vector<16x32xf32>
    %8 = tpu.matmul %1, %7, %cst {dimension_numbers = #tpu.dot_dimension_numbers<[1], [0], [0], [1], [0, 0, 1, 1], [], []>} : vector<16x32xbf16>, vector<32x32xbf16>, vector<16x32xf32> -> vector<16x32xf32>
    %9 = vector.broadcast %3 : vector<1x32xf32> to vector<16x32xf32>
    %10 = arith.addf %8, %9 : vector<16x32xf32>
    %cst_5 = arith.constant 0.000000e+00 : f32
    %11 = vector.broadcast %cst_5 : f32 to vector<16x32xf32>
    %12 = arith.maximumf %10, %11 : vector<16x32xf32>
    %13 = arith.truncf %12 : vector<16x32xf32> to vector<16x32xbf16>
    %c0_6 = arith.constant 0 : index
    %c0_7 = arith.constant 0 : index
    %14 = vector.load %arg3[%c0_6, %c0_7] : memref<32x32xbf16, #tpu.memory_space<vmem>>, vector<32x32xbf16>
    %cst_8 = arith.constant dense<0.000000e+00> : vector<16x32xf32>
    %15 = tpu.matmul %13, %14, %cst_8 {dimension_numbers = #tpu.dot_dimension_numbers<[1], [0], [0], [1], [0, 0, 1, 1], [], []>} : vector<16x32xbf16>, vector<32x32xbf16>, vector<16x32xf32> -> vector<16x32xf32>
    %16 = vector.broadcast %4 : vector<1x32xf32> to vector<16x32xf32>
    %17 = arith.addf %15, %16 : vector<16x32xf32>
    %18 = arith.addf %17, %0 : vector<16x32xf32>
    %cst_9 = arith.constant dense<0.000000e+00> : vector<16xf32>
    %19 = vector.multi_reduction <add>, %18, %cst_9 [1] : vector<16x32xf32> to vector<16xf32>
    %20 = vector.shape_cast %19 : vector<16xf32> to vector<16x1xf32>
    %cst_10 = arith.constant 3.200000e+01 : f32
    %21 = vector.broadcast %cst_10 : f32 to vector<16x1xf32>
    %22 = arith.divf %20, %21 : vector<16x1xf32>
    %23 = vector.broadcast %22 : vector<16x1xf32> to vector<16x32xf32>
    %24 = arith.subf %18, %23 : vector<16x32xf32>
    %25 = arith.mulf %24, %24 : vector<16x32xf32>
    %cst_11 = arith.constant dense<0.000000e+00> : vector<16xf32>
    %26 = vector.multi_reduction <add>, %25, %cst_11 [1] : vector<16x32xf32> to vector<16xf32>
    %27 = vector.shape_cast %26 : vector<16xf32> to vector<16x1xf32>
    %cst_12 = arith.constant 3.200000e+01 : f32
    %28 = vector.broadcast %cst_12 : f32 to vector<16x1xf32>
    %29 = arith.divf %27, %28 : vector<16x1xf32>
    %cst_13 = arith.constant 9.99999974E-6 : f32
    %30 = vector.broadcast %cst_13 : f32 to vector<16x1xf32>
    %31 = arith.addf %29, %30 : vector<16x1xf32>
    %32 = math.rsqrt %31 : vector<16x1xf32>
    %33 = vector.broadcast %32 : vector<16x1xf32> to vector<16x32xf32>
    %34 = arith.mulf %24, %33 : vector<16x32xf32>
    %35 = vector.broadcast %5 : vector<1x32xf32> to vector<16x32xf32>
    %36 = arith.mulf %34, %35 : vector<16x32xf32>
    %37 = vector.broadcast %6 : vector<1x32xf32> to vector<16x32xf32>
    %38 = arith.addf %36, %37 : vector<16x32xf32>
    %c0_14 = arith.constant 0 : index
    %c0_15 = arith.constant 0 : index
    %39 = vector.load %arg5[%c0_14, %c0_15] : memref<16x32xf32, #tpu.memory_space<vmem>>, vector<16x32xf32>
    tpu.vector_store %arg5[%c0_14, %c0_15], %38 {strides = array<i32>} : memref<16x32xf32, #tpu.memory_space<vmem>>, vector<16x32xf32>,
    return
  }
  func.func @transform_0(%arg0: i32) -> (i32, i32) {
    %c0_i32 = arith.constant 0 : i32
    %c0_i32_0 = arith.constant 0 : i32
    return %arg0, %c0_i32 : i32, i32
  }
  func.func @transform_1(%arg0: i32) -> (i32, i32) {
    %c0_i32 = arith.constant 0 : i32
    %c0_i32_0 = arith.constant 0 : i32
    %c0_i32_1 = arith.constant 0 : i32
    return %c0_i32, %c0_i32_0 : i32, i32
  }
  func.func @transform_2(%arg0: i32) -> (i32, i32) {
    %c0_i32 = arith.constant 0 : i32
    %c0_i32_0 = arith.constant 0 : i32
    %c0_i32_1 = arith.constant 0 : i32
    return %c0_i32, %c0_i32_0 : i32, i32
  }
  func.func @transform_3(%arg0: i32) -> (i32, i32) {
    %c0_i32 = arith.constant 0 : i32
    %c0_i32_0 = arith.constant 0 : i32
    %c0_i32_1 = arith.constant 0 : i32
    return %c0_i32, %c0_i32_0 : i32, i32
  }
  func.func @transform_4(%arg0: i32) -> (i32, i32) {
    %c0_i32 = arith.constant 0 : i32
    %c0_i32_0 = arith.constant 0 : i32
    return %arg0, %c0_i32 : i32, i32
  }
}

</mosaic_0001>

<llo_original>
// kernel: tpu_custom_call.1
$region0: #{tpu_custom_call.1}
  #allocation0 [shape = 'u32[]', space=smem, size = 0x4, offset = 0x4, fixed_abs, tag = 'smem constant byte address 0x4 - core index']
  #allocation1 [shape = 'u32[144,128]{1,0:T(1,128)}', space=vmem, size = 0x12000, scoped, tag = 'internal scratch']
  %s0 = inlined_call_operand.hbm [shape: f32[16,32], index: 0, kind: input, shape index: {}]
  %s1 = inlined_call_operand.hbm [shape: bf16[32,32], index: 1, kind: input, shape index: {}]
  %s2 = inlined_call_operand.hbm [shape: bf16[32,32], index: 2, kind: input, shape index: {}]
  %s3 = inlined_call_operand.vmem [shape: f32[4,32], index: 3, kind: input, shape index: {}]
  %s4 = inlined_call_operand.hbm [shape: f32[16,32], index: 4, kind: output, shape index: {}]
  %s5 = sld [smem:[#allocation0]]
  $region38: #{tpu_custom_call.1} parent=0
    _
  %s7 = ssub.s32 1, %s5
  %s8 = scalar_select 0, %s7, %s5
  $region1: #{tpu_custom_call.1} parent=0
    #allocation2 [shape = 'u8[8192]{0}', space=vmem, size = 0x2000, scoped, tag = 'input window, operand 0, single buffered']
    #allocation3 [shape = 's32[1]{0}', space=sflag, size = 0x4, scoped, tag = 'scoped memory for tpu_custom_call.1']
    #allocation4 [shape = 's32[1]{0}', space=sflag, size = 0x4, scoped, tag = 'scoped memory for tpu_custom_call.1']
    #allocation5 [shape = 'u8[8192]{0}', space=vmem, size = 0x2000, scoped, tag = 'input window, operand 1, single buffered']
    #allocation6 [shape = 's32[1]{0}', space=sflag, size = 0x4, scoped, tag = 'scoped memory for tpu_custom_call.1']
    #allocation7 [shape = 'u8[8192]{0}', space=vmem, size = 0x2000, scoped, tag = 'input window, operand 2, single buffered']
    #allocation8 [shape = 'u8[8192]{0}', space=vmem, size = 0x2000, scoped, tag = 'output window, operand 0, single buffered']
    %9 = vsyncpa [#allocation3], 0
    %10 = vsyncpa [#allocation6], 0
    %11 = vsyncpa [#allocation4], 0
    // Predicated region
    $region2: #{tpu_custom_call.1} parent=1 // pred_check
      _
    $region3: #{tpu_custom_call.1} parent=1 // pred_check_branch
      %13 = sbr.rel (0) target = $region5
    $region4: #{tpu_custom_call.1} parent=1 // pred_region
      %s15 = ssub.s32 256, 256
      %16 = vsyncadd [#allocation3], %s15
      %s17 = sshll.u32 [#allocation2], 4
      %s18 = int_to_ptr.vmem [resolvable:$true] %s17
      %23 = dma.hbm_to_vmem [thread:$0]  %s0, 256, %s18, [#allocation3], 128, 128, 8
    $region5: #{tpu_custom_call.1} parent=1 // pred_fallthru
      _
    // Predicated region
    $region6: #{tpu_custom_call.1} parent=1 // pred_check
      _
    $region7: #{tpu_custom_call.1} parent=1 // pred_check_branch
      %25 = sbr.rel (0) target = $region9
    $region8: #{tpu_custom_call.1} parent=1 // pred_region
      %s27 = ssub.s32 256, 256
      %28 = vsyncadd [#allocation6], %s27
      %s29 = sshll.u32 [#allocation5], 4
      %s30 = int_to_ptr.vmem [resolvable:$true] %s29
      %35 = dma.hbm_to_vmem [thread:$0]  %s1, 256, %s30, [#allocation6], 64, 64, 4
    $region9: #{tpu_custom_call.1} parent=1 // pred_fallthru
      _
    // Predicated region
    $region10: #{tpu_custom_call.1} parent=1 // pred_check
      _
    $region11: #{tpu_custom_call.1} parent=1 // pred_check_branch
      %37 = sbr.rel (0) target = $region13
    $region12: #{tpu_custom_call.1} parent=1 // pred_region
      %s39 = ssub.s32 256, 256
      %40 = vsyncadd [#allocation6], %s39
      %s41 = sshll.u32 [#allocation7], 4
      %s42 = int_to_ptr.vmem [resolvable:$true] %s41
      %47 = dma.hbm_to_vmem [thread:$0]  %s2, 256, %s42, [#allocation6], 64, 64, 4
    $region13: #{tpu_custom_call.1} parent=1 // pred_fallthru
      _
    // Predicated region
    $region14: #{tpu_custom_call.1} parent=1 // pred_check
      _
    $region15: #{tpu_custom_call.1} parent=1 // pred_check_branch
      %49 = sbr.rel (0) target = $region17
    $region16: #{tpu_custom_call.1} parent=1 // pred_region
      _
    $region17: #{tpu_custom_call.1} parent=1 // pred_fallthru
      _
    // Predicated region
    $region18: #{tpu_custom_call.1} parent=1 // pred_check
      _
    $region19: #{tpu_custom_call.1} parent=1 // pred_check_branch
      %51 = sbr.rel (0) target = $region21
    $region20: #{tpu_custom_call.1} parent=1 // pred_region
      %52 = dma.done [#allocation3], 256
    $region21: #{tpu_custom_call.1} parent=1 // pred_fallthru
      _
    // Predicated region
    $region22: #{tpu_custom_call.1} parent=1 // pred_check
      _
    $region23: #{tpu_custom_call.1} parent=1 // pred_check_branch
      %54 = sbr.rel (0) target = $region25
    $region24: #{tpu_custom_call.1} parent=1 // pred_region
      %55 = dma.done [#allocation6], 256
    $region25: #{tpu_custom_call.1} parent=1 // pred_fallthru
      _
    // Predicated region
    $region26: #{tpu_custom_call.1} parent=1 // pred_check
      _
    $region27: #{tpu_custom_call.1} parent=1 // pred_check_branch
      %57 = sbr.rel (0) target = $region29
    $region28: #{tpu_custom_call.1} parent=1 // pred_region
      %58 = dma.done [#allocation6], 256
    $region29: #{tpu_custom_call.1} parent=1 // pred_fallthru
      _
    %v60 = vld [vmem:[#allocation2] sm:$0xff]
    %v61 = vld [vmem:[#allocation2 + $0x8] sm:$0xff]
    %v62 = vpack.c.bf16 %v61, %v60
    %v63 = vld [vmem:[%s3] sm:$0xf]
    %v64 = vld [vmem:[#allocation5] sm:$0xf]
    %v65 = vld [vmem:[#allocation5 + $0x4] sm:$0xf]
    %v66 = vld [vmem:[#allocation5 + $0x8] sm:$0xf]
    %v67 = vld [vmem:[#allocation5 + $0xc] sm:$0xf]
    %v68 = vlaneseq
    %v69 = vshrl.u32 %v68, 7
    %v70 = vsub.s32 0, %v69
    %v71 = vrot.slane %v63, %v70
    %v76 = vunpack.c.l.b16 %v64
    %v77 = vunpack.c.l.b16 %v65
    %v78 = vunpack.c.l.b16 %v66
    %v79 = vunpack.c.l.b16 %v67
    %v80 = vpack.c.b16 %v77, %v76
    %v81 = vpack.c.b16 %v79, %v78
    %vm84 = vcmask 261120
    %v86 = vsel %vm84, %v62, 0
    %88 = vmatprep.subr.bf16.mxu0 0
    %89 = vmatpush1.bf16.msra.mxu0 %v80
    %90 = vmatprep.subr.bf16.mxu0 0
    %91 = vmatpush1.bf16.msra.mxu0 %v81
    %92 = vmatprep.subr.bf16.mxu0 0
    %93 = vmatpush1.bf16.msra.mxu0 0
    %94 = vmatprep.subr.bf16.mxu0 0
    %95 = vmatpush1.bf16.msra.mxu0 0
    %96 = vmatprep.subr.bf16.mxu0 0
    %97 = vmatpush1.bf16.msra.mxu0 0
    %98 = vmatprep.subr.bf16.mxu0 0
    %99 = vmatpush1.bf16.msra.mxu0 0
    %100 = vmatprep.subr.bf16.mxu0 0
    %101 = vmatpush1.bf16.msra.mxu0 0
    %102 = vmatprep.subr.bf16.mxu0 0
    %103 = vmatpush1.bf16.msra.mxu0 0
    %104 = vmatprep.subr.bf16.mxu0 0
    %105 = vmatpush1.bf16.msra.mxu0 0
    %106 = vmatprep.subr.bf16.mxu0 0
    %107 = vmatpush1.bf16.msra.mxu0 0
    %108 = vmatprep.subr.bf16.mxu0 0
    %109 = vmatpush1.bf16.msra.mxu0 0
    %110 = vmatprep.subr.bf16.mxu0 0
    %111 = vmatpush1.bf16.msra.mxu0 0
    %112 = vmatprep.subr.bf16.mxu0 0
    %113 = vmatpush1.bf16.msra.mxu0 0
    %114 = vmatprep.subr.bf16.mxu0 0
    %115 = vmatpush1.bf16.msra.mxu0 0
    %116 = vmatprep.subr.bf16.mxu0 0
    %117 = vmatpush1.bf16.msra.mxu0 0
    %118 = vmatprep.subr.bf16.mxu0 0
    %119 = vmatpush1.bf16.msra.mxu0 0
    %120 = vmatprep.mubr.bf16.mxu0 0
    %121 = vmatmul.mubr.bf16.gmra.mrb[0].mxu0 %v86
    %v122 = vpop.f32.mrb[0].mxu0
    %v123 = vadd.f32 %v71, %v122
    %v124 = vpop.f32.mrb[0].mxu0
    %v125 = vpop.f32.mrb[0].mxu0
    %v126 = vadd.f32 %v71, %v125
    %v127 = vpop.f32.mrb[0].mxu0
    %128 = vdwg.mxu0
    %v129 = vmax.f32 %v123, 0.0
    %v130 = vmax.f32 %v126, 0.0
    %v131 = vpack.c.bf16 %v130, %v129
    %v132 = vld [vmem:[#allocation7] sm:$0xf]
    %v133 = vld [vmem:[#allocation7 + $0x4] sm:$0xf]
    %v134 = vld [vmem:[#allocation7 + $0x8] sm:$0xf]
    %v135 = vld [vmem:[#allocation7 + $0xc] sm:$0xf]
    %v136 = vlaneseq
    %v137 = vshrl.u32 %v136, 7
    %v138 = vsub.s32 1, %v137
    %v139 = vrot.slane %v63, %v138
    %v144 = vunpack.c.l.b16 %v132
    %v145 = vunpack.c.l.b16 %v133
    %v146 = vunpack.c.l.b16 %v134
    %v147 = vunpack.c.l.b16 %v135
    %v148 = vpack.c.b16 %v145, %v144
    %v149 = vpack.c.b16 %v147, %v146
    %v153 = vsel %vm84, %v131, 0
    %155 = vmatprep.subr.bf16.mxu0 0
    %156 = vmatpush1.bf16.msra.mxu0 %v148
    %157 = vmatprep.subr.bf16.mxu0 0
    %158 = vmatpush1.bf16.msra.mxu0 %v149
    %159 = vmatprep.subr.bf16.mxu0 0
    %160 = vmatpush1.bf16.msra.mxu0 0
    %161 = vmatprep.subr.bf16.mxu0 0
    %162 = vmatpush1.bf16.msra.mxu0 0
    %163 = vmatprep.subr.bf16.mxu0 0
    %164 = vmatpush1.bf16.msra.mxu0 0
    %165 = vmatprep.subr.bf16.mxu0 0
    %166 = vmatpush1.bf16.msra.mxu0 0
    %167 = vmatprep.subr.bf16.mxu0 0
    %168 = vmatpush1.bf16.msra.mxu0 0
    %169 = vmatprep.subr.bf16.mxu0 0
    %170 = vmatpush1.bf16.msra.mxu0 0
    %171 = vmatprep.subr.bf16.mxu0 0
    %172 = vmatpush1.bf16.msra.mxu0 0
    %173 = vmatprep.subr.bf16.mxu0 0
    %174 = vmatpush1.bf16.msra.mxu0 0
    %175 = vmatprep.subr.bf16.mxu0 0
    %176 = vmatpush1.bf16.msra.mxu0 0
    %177 = vmatprep.subr.bf16.mxu0 0
    %178 = vmatpush1.bf16.msra.mxu0 0
    %179 = vmatprep.subr.bf16.mxu0 0
    %180 = vmatpush1.bf16.msra.mxu0 0
    %181 = vmatprep.subr.bf16.mxu0 0
    %182 = vmatpush1.bf16.msra.mxu0 0
    %183 = vmatprep.subr.bf16.mxu0 0
    %184 = vmatpush1.bf16.msra.mxu0 0
    %185 = vmatprep.subr.bf16.mxu0 0
    %186 = vmatpush1.bf16.msra.mxu0 0
    %187 = vmatprep.mubr.bf16.mxu0 0
    %188 = vmatmul.mubr.bf16.gmra.mrb[0].mxu0 %v153
    %v189 = vpop.f32.mrb[0].mxu0
    %v190 = vadd.f32 %v139, %v189
    %v191 = vpop.f32.mrb[0].mxu0
    %v192 = vpop.f32.mrb[0].mxu0
    %v193 = vadd.f32 %v139, %v192
    %v194 = vpop.f32.mrb[0].mxu0
    %195 = vdwg.mxu0
    %v196 = vadd.f32 %v190, %v60
    %v197 = vadd.f32 %v193, %v61
    %v198 = vsel %vm84, %v196, 0.0
    %199 = vadd.xlane.f32.xlu0 %v198
    %v200 = vpop.xlane.xlu0 %199
    %v201 = vsel %vm84, %v197, 0.0
    %202 = vadd.xlane.f32.xlu0 %v201
    %v203 = vpop.xlane.xlu0 %202
    %v204 = vrcp.pop 32.0
    %v205 = vmul.f32 %v200, %v204
    %v206 = vmul.f32 %v203, %v204
    %v207 = vsub.f32 %v196, %v205
    %v208 = vsub.f32 %v197, %v206
    %v209 = vmul.f32 %v207, %v207
    %v210 = vmul.f32 %v208, %v208
    %v211 = vsel %vm84, %v209, 0.0
    %212 = vadd.xlane.f32.xlu0 %v211
    %v213 = vpop.xlane.xlu0 %212
    %v214 = vsel %vm84, %v210, 0.0
    %215 = vadd.xlane.f32.xlu0 %v214
    %v216 = vpop.xlane.xlu0 %215
    %v217 = vmul.f32 %v213, %v204
    %v218 = vmul.f32 %v216, %v204
    %v219 = vadd.f32 %v217, 1e-05
    %v220 = vadd.f32 %v218, 1e-05
    %v221 = vrsqrt.pop %v219
    %v222 = vrsqrt.pop %v220
    %v223 = vmul.f32 %v207, %v221
    %v224 = vmul.f32 %v208, %v222
    %v225 = vlaneseq
    %v226 = vshrl.u32 %v225, 7
    %v227 = vsub.s32 2, %v226
    %v228 = vrot.slane %v63, %v227
    %v229 = vmul.f32 %v223, %v228
    %v230 = vmul.f32 %v224, %v228
    %v231 = vlaneseq
    %v232 = vshrl.u32 %v231, 7
    %v233 = vsub.s32 3, %v232
    %v234 = vrot.slane %v63, %v233
    %v235 = vadd.f32 %v229, %v234
    %v236 = vadd.f32 %v230, %v234
    %237 = vst.msk [vmem:[#allocation8] sm:$0xff] %vm84, %v235
    %238 = vst.msk [vmem:[#allocation8 + $0x8] sm:$0xff] %vm84, %v236
    // Predicated region
    $region30: #{tpu_custom_call.1} parent=1 // pred_check
      _
    $region31: #{tpu_custom_call.1} parent=1 // pred_check_branch
      %240 = sbr.rel (0) target = $region33
    $region32: #{tpu_custom_call.1} parent=1 // pred_region
      %s242 = ssub.s32 256, 256
      %243 = vsyncadd [#allocation4], %s242
      %s244 = sshll.u32 [#allocation8], 4
      %s245 = int_to_ptr.vmem [resolvable:$true] %s244
      %250 = dma.vmem_to_hbm [thread:$0]  %s245, 256, %s4, [#allocation4], 128, 128, 8
    $region33: #{tpu_custom_call.1} parent=1 // pred_fallthru
      _
    // Predicated region
    $region34: #{tpu_custom_call.1} parent=1 // pred_check
      _
    $region35: #{tpu_custom_call.1} parent=1 // pred_check_branch
      %252 = sbr.rel (0) target = $region37
    $region36: #{tpu_custom_call.1} parent=1 // pred_region
      %253 = dma.done [#allocation4], 256
    $region37: #{tpu_custom_call.1} parent=1 // pred_fallthru
      _
    %254 = vsyncpa [#allocation3], 1
    %255 = vsyncpa [#allocation6], 1
    %256 = vsyncpa [#allocation4], 1

</llo_original>
